<compile_context>
chip_gen: v5e
topology: v5e:2x2
jax: 0.10.0
libtpu: 0.0.40
codegen_flags: <defaults>
</compile_context>

<pallas_src>
import jax
import jax.numpy as jnp
from jax.experimental import pallas as pl
from jax.experimental.pallas import tpu as pltpu

LANES = 128
TARGET_TILE_BYTES = 2 * 1024 * 1024  # ~2 MiB per buffer (safe on v5e/v6e/v7x defaults)


def _sublane_multiple(dtype) -> int:
    """Second-to-last-dim tiling requirement per dtype (packs along sublanes)."""
    itemsize = jnp.dtype(dtype).itemsize
    return max(8, 32 // itemsize)  # f32 -> 8, bf16 -> 16, int8/fp8 -> 32


def scale_kernel(scale_ref, x_ref, o_ref):
    # scale_ref: SMEM (1,) f32 learned scalar
    # x_ref / o_ref: VMEM (tile_r, 128) tiles of the flattened input
    s = scale_ref[0].astype(x_ref.dtype)   # cast once; native-dtype VPU multiply
    o_ref[...] = x_ref[...] * s


def scale_forward(x, scale, *, target_tile_bytes=TARGET_TILE_BYTES):
    """x: any-shape array (NCHW in the reference); scale: shape (1,) f32 param."""
    orig_shape = x.shape
    orig_dtype = x.dtype
    total = x.size
    itemsize = jnp.dtype(orig_dtype).itemsize
    sub = _sublane_multiple(orig_dtype)

    scale_f32 = jnp.reshape(scale, (1,)).astype(jnp.float32)
    scale_native = scale_f32[0].astype(orig_dtype)

    rows = total // LANES            # full 128-lane rows (the lane-dense prefix)
    tail = total - rows * LANES      # <128-element ragged tail (handled outside kernel)

    x_flat = jnp.reshape(x, (-1,))

    if rows == 0:
        # Fewer than 128 elements: a single fused XLA multiply is optimal.
        return jnp.reshape(x_flat * scale_native, orig_shape)

    # Dtype-aware tile rows targeting ~target_tile_bytes per buffer.
    tile_cap = max(sub, (target_tile_bytes // (LANES * itemsize)) // sub * sub)
    tile_r = rows if rows <= tile_cap else tile_cap   # full-extent block is always legal
    grid_r = pl.cdiv(rows, tile_r)                    # partial trailing block is masked

    x2d = jnp.reshape(x_flat[: rows * LANES], (rows, LANES))

    out2d = pl.pallas_call(
        scale_kernel,
        out_shape=jax.ShapeDtypeStruct((rows, LANES), orig_dtype),
        grid_spec=pltpu.PrefetchScalarGridSpec(
            num_scalar_prefetch=0,
            grid=(grid_r,),
            in_specs=[
                pl.BlockSpec(memory_space=pltpu.SMEM),            # scalar param (f32)
                pl.BlockSpec((tile_r, LANES), lambda i: (i, 0)),  # input tile
            ],
            out_specs=pl.BlockSpec((tile_r, LANES), lambda i: (i, 0)),
        ),
        compiler_params=pltpu.CompilerParams(
            dimension_semantics=("parallel",),
        ),
    )(scale_f32, x2d)

    out_flat = jnp.reshape(out2d, (-1,))
    if tail:
        tail_out = x_flat[rows * LANES:] * scale_native
        out_flat = jnp.concatenate([out_flat, tail_out])
    return jnp.reshape(out_flat, orig_shape)


if __name__ == "__main__":
    key = jax.random.PRNGKey(0)
    k_scale, k_x1, k_x2, k_x3, k_x4 = jax.random.split(key, 5)

    # Parameter init: nn.init.normal_(self.scale, mean=1, std=0.01), shape (1,)
    scale = 1.0 + 0.01 * jax.random.normal(k_scale, (1,), dtype=jnp.float32)

    # 1) Canonical small NCHW input: 128-divisible, single full-extent block.
    x1 = jax.random.normal(k_x1, (2, 4, 16, 16), dtype=jnp.float32)
    out1 = jax.block_until_ready(scale_forward(x1, scale))
    ref1 = x1 * scale[0]
    assert out1.shape == x1.shape and out1.dtype == x1.dtype
    assert jnp.allclose(out1, ref1, atol=1e-6, rtol=1e-6)

    # 2) 128-divisible but not tile-divisible: multi-block grid with a masked
    #    partial trailing block (small tile target forces grid > 1).
    x2 = jax.random.normal(k_x2, (3, 5, 16, 128), dtype=jnp.float32)
    out2 = jax.block_until_ready(scale_forward(x2, scale, target_tile_bytes=64 * 1024))
    ref2 = x2 * scale[0]
    assert jnp.allclose(out2, ref2, atol=1e-6, rtol=1e-6)

    # 3) Ragged total (not 128-divisible): kernel on the prefix + tiny XLA tail.
    x3 = jax.random.normal(k_x3, (3, 5, 7, 9), dtype=jnp.float32)
    out3 = jax.block_until_ready(scale_forward(x3, scale))
    ref3 = x3 * scale[0]
    assert out3.shape == x3.shape
    assert jnp.allclose(out3, ref3, atol=1e-6, rtol=1e-6)

    # 4) bf16 input: native bf16 multiply inside the kernel.
    x4 = jax.random.normal(k_x4, (2, 8, 16, 16), dtype=jnp.bfloat16)
    out4 = jax.block_until_ready(scale_forward(x4, scale))
    ref4 = x4 * scale[0].astype(jnp.bfloat16)
    assert out4.dtype == jnp.bfloat16
    assert jnp.allclose(out4.astype(jnp.float32), ref4.astype(jnp.float32),
                        atol=1e-2, rtol=1e-2)

    print("KERNEL_OK")
</pallas_src>

<mosaic_0001>
module attributes {stable_mosaic.version = 11 : i64} {
  func.func @scale_kernel(%arg0: i32, %arg1: memref<1xf32, #tpu.memory_space<smem>>, %arg2: memref<16x128xf32, #tpu.memory_space<vmem>>, %arg3: memref<16x128xf32, #tpu.memory_space<vmem>>) attributes {dimension_semantics = [#tpu.dimension_semantics<parallel>], iteration_bounds = array<i64: 1>, scalar_prefetch = 0 : i64, scratch_operands = 0 : i64, tpu.core_type = #tpu.core_type<tc>, window_params = [{transform_indices = @transform_0, window_bounds = array<i64: 1>}, {transform_indices = @transform_1, window_bounds = array<i64: 16, 128>}, {transform_indices = @transform_2, window_bounds = array<i64: 16, 128>}]} {
    %c0 = arith.constant 0 : index
    %0 = memref.load %arg1[%c0] : memref<1xf32, #tpu.memory_space<smem>>
    %c0_0 = arith.constant 0 : index
    %c0_1 = arith.constant 0 : index
    %1 = vector.load %arg2[%c0_0, %c0_1] : memref<16x128xf32, #tpu.memory_space<vmem>>, vector<16x128xf32>
    %2 = vector.broadcast %0 : f32 to vector<16x128xf32>
    %3 = arith.mulf %1, %2 : vector<16x128xf32>
    %c0_2 = arith.constant 0 : index
    %c0_3 = arith.constant 0 : index
    %4 = vector.load %arg3[%c0_2, %c0_3] : memref<16x128xf32, #tpu.memory_space<vmem>>, vector<16x128xf32>
    tpu.vector_store %arg3[%c0_2, %c0_3], %3 {strides = array<i32>} : memref<16x128xf32, #tpu.memory_space<vmem>>, vector<16x128xf32>,
    return
  }
  func.func @transform_0(%arg0: i32) -> i32 {
    %c0_i32 = arith.constant 0 : i32
    %c0_i32_0 = arith.constant 0 : i32
    return %c0_i32 : i32
  }
  func.func @transform_1(%arg0: i32) -> (i32, i32) {
    %c0_i32 = arith.constant 0 : i32
    %c0_i32_0 = arith.constant 0 : i32
    return %arg0, %c0_i32 : i32, i32
  }
  func.func @transform_2(%arg0: i32) -> (i32, i32) {
    %c0_i32 = arith.constant 0 : i32
    %c0_i32_0 = arith.constant 0 : i32
    return %arg0, %c0_i32 : i32, i32
  }
}

</mosaic_0001>

<llo_original>
// kernel: tpu_custom_call.1
$region0: #{tpu_custom_call.1}
  #allocation0 [shape = 'u32[]', space=smem, size = 0x4, offset = 0x4, fixed_abs, tag = 'smem constant byte address 0x4 - core index']
  #allocation1 [shape = 'u32[72,128]{1,0:T(1,128)}', space=vmem, size = 0x9000, scoped, tag = 'internal scratch']
  #allocation2 [shape = 'f32[1]{0:T(128)S(6)}', space=smem, size = 0x200, scoped, tag = 'scoped memory for tpu_custom_call.1']
  %s0 = inlined_call_operand.<no memory space> [shape: f32[1], index: 0, kind: input, shape index: {}]
  %s1 = inlined_call_operand.hbm [shape: f32[16,128], index: 1, kind: input, shape index: {}]
  %s2 = inlined_call_operand.hbm [shape: f32[16,128], index: 2, kind: output, shape index: {}]
  %s3 = sld [smem:[#allocation0]]
  $region22: #{tpu_custom_call.1} parent=0
    _
  %s5 = ssub.s32 1, %s3
  %s6 = scalar_select 0, %s5, %s3
  %7 = sst [smem:[#allocation2]] %s0
  $region1: #{tpu_custom_call.1} parent=0
    #allocation3 [shape = 'u8[8192]{0}', space=vmem, size = 0x2000, scoped, tag = 'input window, operand 1, single buffered']
    #allocation4 [shape = 's32[1]{0}', space=sflag, size = 0x4, scoped, tag = 'scoped memory for tpu_custom_call.1']
    #allocation5 [shape = 's32[1]{0}', space=sflag, size = 0x4, scoped, tag = 'scoped memory for tpu_custom_call.1']
    #allocation6 [shape = 'u8[8192]{0}', space=vmem, size = 0x2000, scoped, tag = 'output window, operand 0, single buffered']
    %8 = vsyncpa [#allocation4], 0
    %9 = vsyncpa [#allocation5], 0
    // Predicated region
    $region2: #{tpu_custom_call.1} parent=1 // pred_check
      _
    $region3: #{tpu_custom_call.1} parent=1 // pred_check_branch
      %11 = sbr.rel (0) target = $region5
    $region4: #{tpu_custom_call.1} parent=1 // pred_region
      _
    $region5: #{tpu_custom_call.1} parent=1 // pred_fallthru
      _
    // Predicated region
    $region6: #{tpu_custom_call.1} parent=1 // pred_check
      _
    $region7: #{tpu_custom_call.1} parent=1 // pred_check_branch
      %13 = sbr.rel (0) target = $region9
    $region8: #{tpu_custom_call.1} parent=1 // pred_region
      %15 = vsyncadd [#allocation4], 0
      %s16 = sshll.u32 %s1, 4
      %s17 = int_to_ptr.hbm [resolvable:$true] %s16
      %s18 = sshll.u32 [#allocation3], 4
      %s19 = int_to_ptr.vmem [resolvable:$true] %s18
      %24 = dma.hbm_to_vmem [thread:$0]  %s17, 256, %s19, [#allocation4], 128, 128, 8
    $region9: #{tpu_custom_call.1} parent=1 // pred_fallthru
      _
    // Predicated region
    $region10: #{tpu_custom_call.1} parent=1 // pred_check
      _
    $region11: #{tpu_custom_call.1} parent=1 // pred_check_branch
      %26 = sbr.rel (0) target = $region13
    $region12: #{tpu_custom_call.1} parent=1 // pred_region
      %28 = dma.done [#allocation4], 256
    $region13: #{tpu_custom_call.1} parent=1 // pred_fallthru
      _
    %s29 = sld [smem:[#allocation2]]
    %v30 = vld [vmem:[#allocation3] sm:$0xff]
    %v31 = vld [vmem:[#allocation3 + $0x8] sm:$0xff]
    %v32 = vstv %s29
    %v33 = vmul.f32 %v30, %v32
    %v34 = vmul.f32 %v31, %v32
    %35 = vst [vmem:[#allocation6] sm:$0xff] %v33
    %36 = vst [vmem:[#allocation6 + $0x8] sm:$0xff] %v34
    // Predicated region
    $region14: #{tpu_custom_call.1} parent=1 // pred_check
      _
    $region15: #{tpu_custom_call.1} parent=1 // pred_check_branch
      %38 = sbr.rel (0) target = $region17
    $region16: #{tpu_custom_call.1} parent=1 // pred_region
      %40 = vsyncadd [#allocation5], 0
      %s41 = sshll.u32 [#allocation6], 4
      %s42 = int_to_ptr.vmem [resolvable:$true] %s41
      %s43 = sshll.u32 %s2, 4
      %s44 = int_to_ptr.hbm [resolvable:$true] %s43
      %49 = dma.vmem_to_hbm [thread:$0]  %s42, 256, %s44, [#allocation5], 128, 128, 8
    $region17: #{tpu_custom_call.1} parent=1 // pred_fallthru
      _
    // Predicated region
    $region18: #{tpu_custom_call.1} parent=1 // pred_check
      _
    $region19: #{tpu_custom_call.1} parent=1 // pred_check_branch
      %51 = sbr.rel (0) target = $region21
    $region20: #{tpu_custom_call.1} parent=1 // pred_region
      %53 = dma.done [#allocation5], 256
    $region21: #{tpu_custom_call.1} parent=1 // pred_fallthru
      _
    %54 = vsyncpa [#allocation4], 1
    %55 = vsyncpa [#allocation5], 1

</llo_original>
